<compile_context>
chip_gen: v5e
topology: v5e:2x2
jax: 0.10.0
libtpu: 0.0.40
codegen_flags: <defaults>
</compile_context>

<pallas_src>
import jax
import jax.numpy as jnp
from jax.experimental import pallas as pl
from jax.experimental.pallas import tpu as pltpu


def _round_up(x, m):
    return (x + m - 1) // m * m


def mlp_g_kernel(z_ref, w1_ref, b1_ref, w2_ref, b2_ref,
                 w3_ref, b3_ref, w4_ref, b4_ref, o_ref):
    # Layer 1: Linear(nz, ngh) + ReLU   (bf16 matmul, f32 accumulate, f32 VPU)
    h = jnp.dot(z_ref[...].astype(jnp.bfloat16), w1_ref[...],
                preferred_element_type=jnp.float32)
    h = jnp.maximum(h + b1_ref[...], 0.0)
    # Layer 2: Linear(ngh, ngh) + ReLU
    h = jnp.dot(h.astype(jnp.bfloat16), w2_ref[...],
                preferred_element_type=jnp.float32)
    h = jnp.maximum(h + b2_ref[...], 0.0)
    # Layer 3: Linear(ngh, ngh) + ReLU
    h = jnp.dot(h.astype(jnp.bfloat16), w3_ref[...],
                preferred_element_type=jnp.float32)
    h = jnp.maximum(h + b3_ref[...], 0.0)
    # Layer 4: Linear(ngh, nc*isize*isize), no activation
    out = jnp.dot(h.astype(jnp.bfloat16), w4_ref[...],
                  preferred_element_type=jnp.float32)
    o_ref[...] = (out + b4_ref[...]).astype(o_ref.dtype)


def init_params(key, nz, ngh, out_dim, dtype=jnp.float32):
    """Deterministic init matching nn.Linear shapes (stored transposed).
    Each weight is (in_features, out_features); each bias is (1, out_features)."""
    dims = [(nz, ngh), (ngh, ngh), (ngh, ngh), (ngh, out_dim)]
    params = []
    for fan_in, fan_out in dims:
        key, kw, kb = jax.random.split(key, 3)
        bound = 1.0 / (fan_in ** 0.5)
        w = jax.random.uniform(kw, (fan_in, fan_out), dtype, -bound, bound)
        b = jax.random.uniform(kb, (1, fan_out), dtype, -bound, bound)
        params.append((w, b))
    return params


def prepare_params(params, *, lane=128):
    """Zero-pad weights to multiples of `lane` on both dims, cast to bf16.
    Biases stay f32 (bias-add happens in f32) and are padded with zeros."""
    prepped = []
    for w, b in params:
        fi, fo = w.shape
        fi_p, fo_p = _round_up(fi, lane), _round_up(fo, lane)
        w_p = jnp.zeros((fi_p, fo_p), jnp.bfloat16).at[:fi, :fo].set(
            w.astype(jnp.bfloat16))
        b_p = jnp.zeros((1, fo_p), jnp.float32).at[:, :fo].set(
            b.astype(jnp.float32))
        prepped.append((w_p, b_p))
    return prepped


def mlp_g_forward(z, prepped_params, nc, isize, nz, *, block_b=256):
    """z: (B, nz) or (B, nz, 1, 1).  Returns (B, nc, isize, isize)."""
    B = z.shape[0]
    z2d = z.reshape(B, nz).astype(jnp.float32)
    out_dim = nc * isize * isize

    (w1, b1), (w2, b2), (w3, b3), (w4, b4) = prepped_params
    nz_p, ngh_p = w1.shape
    out_p = w4.shape[1]

    # Batch tiling: TB is a multiple of 8 (f32 sublane), capped at block_b.
    TB = min(_round_up(block_b, 8), _round_up(B, 8))
    B_pad = _round_up(B, TB)
    nb = B_pad // TB

    # Zero-pad batch + feature dims of z (extra rows/cols are sliced off below).
    z_pad = jnp.zeros((B_pad, nz_p), jnp.float32).at[:B, :nz].set(z2d)

    # VMEM budget: weights are (notionally) double-buffered per input spec.
    w_bytes = sum(int(w.size) * w.dtype.itemsize + int(b.size) * b.dtype.itemsize
                  for w, b in prepped_params)
    io_tile_bytes = TB * (nz_p + out_p) * 4
    act_bytes = 2 * TB * max(ngh_p, out_p) * 4
    est = 2 * w_bytes + 2 * io_tile_bytes + act_bytes
    vmem_limit = int(min(max(2 * est, 32 * 1024 * 1024), 64 * 1024 * 1024))

    flops = 2 * B_pad * (nz_p * ngh_p + 2 * ngh_p * ngh_p + ngh_p * out_p)
    bytes_accessed = int(w_bytes + B_pad * nz_p * 4 + B_pad * out_p * 4)

    def resident(arr):
        # Whole array, same block every grid step -> stays VMEM-resident.
        return pl.BlockSpec(arr.shape, lambda i: (0, 0))

    out_pad = pl.pallas_call(
        mlp_g_kernel,
        out_shape=jax.ShapeDtypeStruct((B_pad, out_p), jnp.float32),
        grid=(nb,),
        in_specs=[pl.BlockSpec((TB, nz_p), lambda i: (i, 0)),
                  resident(w1), resident(b1),
                  resident(w2), resident(b2),
                  resident(w3), resident(b3),
                  resident(w4), resident(b4)],
        out_specs=pl.BlockSpec((TB, out_p), lambda i: (i, 0)),
        compiler_params=pltpu.CompilerParams(
            dimension_semantics=("parallel",),
            vmem_limit_bytes=vmem_limit),
        cost_estimate=pl.CostEstimate(
            flops=flops, transcendentals=0, bytes_accessed=bytes_accessed),
    )(z_pad, w1, b1, w2, b2, w3, b3, w4, b4)

    out2d = out_pad[:B, :out_dim]
    return out2d.reshape(B, nc, isize, isize)


if __name__ == "__main__":
    # Small, forward-consistent shapes.
    B, nc, isize, nz, ngh = 2, 4, 16, 8, 32
    out_dim = nc * isize * isize

    key = jax.random.PRNGKey(0)
    key, kz = jax.random.split(key)
    # Typical GAN usage: noise of shape (B, nz, 1, 1); forward views it to (B, nz).
    z = jax.random.normal(kz, (B, nz, 1, 1), dtype=jnp.float32)

    params = init_params(key, nz, ngh, out_dim)      # logical f32 params
    prepped = prepare_params(params)                 # padded bf16 weights

    out = mlp_g_forward(z, prepped, nc, isize, nz)
    out = jax.block_until_ready(out)

    # Reference in plain JAX with matching numerics (bf16 matmul, f32 accumulate).
    h = z.reshape(B, nz)
    for i, (w, b) in enumerate(params):
        y = jnp.dot(h.astype(jnp.bfloat16), w.astype(jnp.bfloat16),
                    preferred_element_type=jnp.float32) + b
        h = jnp.maximum(y, 0.0) if i < 3 else y
    ref = h.reshape(B, nc, isize, isize)

    assert out.shape == (B, nc, isize, isize)
    assert jnp.allclose(out, ref, atol=5e-2, rtol=5e-2), \
        float(jnp.max(jnp.abs(out - ref)))

    print("KERNEL_OK")
</pallas_src>

<mosaic_0001>
module attributes {stable_mosaic.version = 11 : i64} {
  func.func @mlp_g_kernel(%arg0: i32, %arg1: memref<8x128xf32, #tpu.memory_space<vmem>>, %arg2: memref<128x128xbf16, #tpu.memory_space<vmem>>, %arg3: memref<1x128xf32, #tpu.memory_space<vmem>>, %arg4: memref<128x128xbf16, #tpu.memory_space<vmem>>, %arg5: memref<1x128xf32, #tpu.memory_space<vmem>>, %arg6: memref<128x128xbf16, #tpu.memory_space<vmem>>, %arg7: memref<1x128xf32, #tpu.memory_space<vmem>>, %arg8: memref<128x1024xbf16, #tpu.memory_space<vmem>>, %arg9: memref<1x1024xf32, #tpu.memory_space<vmem>>, %arg10: memref<8x1024xf32, #tpu.memory_space<vmem>>) attributes {dimension_semantics = [#tpu.dimension_semantics<parallel>], iteration_bounds = array<i64: 1>, scalar_prefetch = 0 : i64, scratch_operands = 0 : i64, tpu.core_type = #tpu.core_type<tc>, window_params = [{transform_indices = @transform_0, window_bounds = array<i64: 8, 128>}, {pipeline_mode = #tpu.pipeline_mode<synchronous>, transform_indices = @transform_1, window_bounds = array<i64: 128, 128>}, {pipeline_mode = #tpu.pipeline_mode<synchronous>, transform_indices = @transform_2, window_bounds = array<i64: 1, 128>}, {pipeline_mode = #tpu.pipeline_mode<synchronous>, transform_indices = @transform_3, window_bounds = array<i64: 128, 128>}, {pipeline_mode = #tpu.pipeline_mode<synchronous>, transform_indices = @transform_4, window_bounds = array<i64: 1, 128>}, {pipeline_mode = #tpu.pipeline_mode<synchronous>, transform_indices = @transform_5, window_bounds = array<i64: 128, 128>}, {pipeline_mode = #tpu.pipeline_mode<synchronous>, transform_indices = @transform_6, window_bounds = array<i64: 1, 128>}, {pipeline_mode = #tpu.pipeline_mode<synchronous>, transform_indices = @transform_7, window_bounds = array<i64: 128, 1024>}, {pipeline_mode = #tpu.pipeline_mode<synchronous>, transform_indices = @transform_8, window_bounds = array<i64: 1, 1024>}, {transform_indices = @transform_9, window_bounds = array<i64: 8, 1024>}]} {
    %c0 = arith.constant 0 : index
    %c0_0 = arith.constant 0 : index
    %0 = vector.load %arg1[%c0, %c0_0] : memref<8x128xf32, #tpu.memory_space<vmem>>, vector<8x128xf32>
    %1 = arith.truncf %0 : vector<8x128xf32> to vector<8x128xbf16>
    %c0_1 = arith.constant 0 : index
    %c0_2 = arith.constant 0 : index
    %2 = vector.load %arg2[%c0_1, %c0_2] : memref<128x128xbf16, #tpu.memory_space<vmem>>, vector<128x128xbf16>
    %cst = arith.constant dense<0.000000e+00> : vector<8x128xf32>
    %3 = tpu.matmul %1, %2, %cst {dimension_numbers = #tpu.dot_dimension_numbers<[1], [0], [0], [1], [0, 0, 1, 1], [], []>} : vector<8x128xbf16>, vector<128x128xbf16>, vector<8x128xf32> -> vector<8x128xf32>
    %c0_3 = arith.constant 0 : index
    %c0_4 = arith.constant 0 : index
    %4 = vector.load %arg3[%c0_3, %c0_4] : memref<1x128xf32, #tpu.memory_space<vmem>>, vector<1x128xf32>
    %5 = vector.broadcast %4 : vector<1x128xf32> to vector<8x128xf32>
    %6 = arith.addf %3, %5 : vector<8x128xf32>
    %cst_5 = arith.constant 0.000000e+00 : f32
    %7 = vector.broadcast %cst_5 : f32 to vector<8x128xf32>
    %8 = arith.maximumf %6, %7 : vector<8x128xf32>
    %9 = arith.truncf %8 : vector<8x128xf32> to vector<8x128xbf16>
    %c0_6 = arith.constant 0 : index
    %c0_7 = arith.constant 0 : index
    %10 = vector.load %arg4[%c0_6, %c0_7] : memref<128x128xbf16, #tpu.memory_space<vmem>>, vector<128x128xbf16>
    %cst_8 = arith.constant dense<0.000000e+00> : vector<8x128xf32>
    %11 = tpu.matmul %9, %10, %cst_8 {dimension_numbers = #tpu.dot_dimension_numbers<[1], [0], [0], [1], [0, 0, 1, 1], [], []>} : vector<8x128xbf16>, vector<128x128xbf16>, vector<8x128xf32> -> vector<8x128xf32>
    %c0_9 = arith.constant 0 : index
    %c0_10 = arith.constant 0 : index
    %12 = vector.load %arg5[%c0_9, %c0_10] : memref<1x128xf32, #tpu.memory_space<vmem>>, vector<1x128xf32>
    %13 = vector.broadcast %12 : vector<1x128xf32> to vector<8x128xf32>
    %14 = arith.addf %11, %13 : vector<8x128xf32>
    %cst_11 = arith.constant 0.000000e+00 : f32
    %15 = vector.broadcast %cst_11 : f32 to vector<8x128xf32>
    %16 = arith.maximumf %14, %15 : vector<8x128xf32>
    %17 = arith.truncf %16 : vector<8x128xf32> to vector<8x128xbf16>
    %c0_12 = arith.constant 0 : index
    %c0_13 = arith.constant 0 : index
    %18 = vector.load %arg6[%c0_12, %c0_13] : memref<128x128xbf16, #tpu.memory_space<vmem>>, vector<128x128xbf16>
    %cst_14 = arith.constant dense<0.000000e+00> : vector<8x128xf32>
    %19 = tpu.matmul %17, %18, %cst_14 {dimension_numbers = #tpu.dot_dimension_numbers<[1], [0], [0], [1], [0, 0, 1, 1], [], []>} : vector<8x128xbf16>, vector<128x128xbf16>, vector<8x128xf32> -> vector<8x128xf32>
    %c0_15 = arith.constant 0 : index
    %c0_16 = arith.constant 0 : index
    %20 = vector.load %arg7[%c0_15, %c0_16] : memref<1x128xf32, #tpu.memory_space<vmem>>, vector<1x128xf32>
    %21 = vector.broadcast %20 : vector<1x128xf32> to vector<8x128xf32>
    %22 = arith.addf %19, %21 : vector<8x128xf32>
    %cst_17 = arith.constant 0.000000e+00 : f32
    %23 = vector.broadcast %cst_17 : f32 to vector<8x128xf32>
    %24 = arith.maximumf %22, %23 : vector<8x128xf32>
    %25 = arith.truncf %24 : vector<8x128xf32> to vector<8x128xbf16>
    %c0_18 = arith.constant 0 : index
    %c0_19 = arith.constant 0 : index
    %26 = vector.load %arg8[%c0_18, %c0_19] : memref<128x1024xbf16, #tpu.memory_space<vmem>>, vector<128x1024xbf16>
    %cst_20 = arith.constant dense<0.000000e+00> : vector<8x1024xf32>
    %27 = tpu.matmul %25, %26, %cst_20 {dimension_numbers = #tpu.dot_dimension_numbers<[1], [0], [0], [1], [0, 0, 1, 1], [], []>} : vector<8x128xbf16>, vector<128x1024xbf16>, vector<8x1024xf32> -> vector<8x1024xf32>
    %c0_21 = arith.constant 0 : index
    %c0_22 = arith.constant 0 : index
    %28 = vector.load %arg9[%c0_21, %c0_22] : memref<1x1024xf32, #tpu.memory_space<vmem>>, vector<1x1024xf32>
    %29 = vector.broadcast %28 : vector<1x1024xf32> to vector<8x1024xf32>
    %30 = arith.addf %27, %29 : vector<8x1024xf32>
    %c0_23 = arith.constant 0 : index
    %c0_24 = arith.constant 0 : index
    %31 = vector.load %arg10[%c0_23, %c0_24] : memref<8x1024xf32, #tpu.memory_space<vmem>>, vector<8x1024xf32>
    tpu.vector_store %arg10[%c0_23, %c0_24], %30 {strides = array<i32>} : memref<8x1024xf32, #tpu.memory_space<vmem>>, vector<8x1024xf32>,
    return
  }
  func.func @transform_0(%arg0: i32) -> (i32, i32) {
    %c0_i32 = arith.constant 0 : i32
    %c0_i32_0 = arith.constant 0 : i32
    return %arg0, %c0_i32 : i32, i32
  }
  func.func @transform_1(%arg0: i32) -> (i32, i32) {
    %c0_i32 = arith.constant 0 : i32
    %c0_i32_0 = arith.constant 0 : i32
    %c0_i32_1 = arith.constant 0 : i32
    return %c0_i32, %c0_i32_0 : i32, i32
  }
  func.func @transform_2(%arg0: i32) -> (i32, i32) {
    %c0_i32 = arith.constant 0 : i32
    %c0_i32_0 = arith.constant 0 : i32
    %c0_i32_1 = arith.constant 0 : i32
    return %c0_i32, %c0_i32_0 : i32, i32
  }
  func.func @transform_3(%arg0: i32) -> (i32, i32) {
    %c0_i32 = arith.constant 0 : i32
    %c0_i32_0 = arith.constant 0 : i32
    %c0_i32_1 = arith.constant 0 : i32
    return %c0_i32, %c0_i32_0 : i32, i32
  }
  func.func @transform_4(%arg0: i32) -> (i32, i32) {
    %c0_i32 = arith.constant 0 : i32
    %c0_i32_0 = arith.constant 0 : i32
    %c0_i32_1 = arith.constant 0 : i32
    return %c0_i32, %c0_i32_0 : i32, i32
  }
  func.func @transform_5(%arg0: i32) -> (i32, i32) {
    %c0_i32 = arith.constant 0 : i32
    %c0_i32_0 = arith.constant 0 : i32
    %c0_i32_1 = arith.constant 0 : i32
    return %c0_i32, %c0_i32_0 : i32, i32
  }
  func.func @transform_6(%arg0: i32) -> (i32, i32) {
    %c0_i32 = arith.constant 0 : i32
    %c0_i32_0 = arith.constant 0 : i32
    %c0_i32_1 = arith.constant 0 : i32
    return %c0_i32, %c0_i32_0 : i32, i32
  }
  func.func @transform_7(%arg0: i32) -> (i32, i32) {
    %c0_i32 = arith.constant 0 : i32
    %c0_i32_0 = arith.constant 0 : i32
    %c0_i32_1 = arith.constant 0 : i32
    return %c0_i32, %c0_i32_0 : i32, i32
  }
  func.func @transform_8(%arg0: i32) -> (i32, i32) {
    %c0_i32 = arith.constant 0 : i32
    %c0_i32_0 = arith.constant 0 : i32
    %c0_i32_1 = arith.constant 0 : i32
    return %c0_i32, %c0_i32_0 : i32, i32
  }
  func.func @transform_9(%arg0: i32) -> (i32, i32) {
    %c0_i32 = arith.constant 0 : i32
    %c0_i32_0 = arith.constant 0 : i32
    return %arg0, %c0_i32 : i32, i32
  }
}

</mosaic_0001>

<llo_original>
// kernel: tpu_custom_call.1
$region0: #{tpu_custom_call.1}
  #allocation0 [shape = 'u32[]', space=smem, size = 0x4, offset = 0x4, fixed_abs, tag = 'smem constant byte address 0x4 - core index']
  #allocation1 [shape = 'u32[72,128]{1,0:T(1,128)}', space=vmem, size = 0x9000, scoped, tag = 'internal scratch']
  %s0 = inlined_call_operand.hbm [shape: f32[8,128], index: 0, kind: input, shape index: {}]
  %s1 = inlined_call_operand.hbm [shape: bf16[128,128], index: 1, kind: input, shape index: {}]
  %s2 = inlined_call_operand.vmem [shape: f32[1,128], index: 2, kind: input, shape index: {}]
  %s3 = inlined_call_operand.hbm [shape: bf16[128,128], index: 3, kind: input, shape index: {}]
  %s4 = inlined_call_operand.vmem [shape: f32[1,128], index: 4, kind: input, shape index: {}]
  %s5 = inlined_call_operand.hbm [shape: bf16[128,128], index: 5, kind: input, shape index: {}]
  %s6 = inlined_call_operand.vmem [shape: f32[1,128], index: 6, kind: input, shape index: {}]
  %s7 = inlined_call_operand.hbm [shape: bf16[128,1024], index: 7, kind: input, shape index: {}]
  %s8 = inlined_call_operand.hbm [shape: f32[1,1024], index: 8, kind: input, shape index: {}]
  %s9 = inlined_call_operand.hbm [shape: f32[8,1024], index: 9, kind: output, shape index: {}]
  %s10 = sld [smem:[#allocation0]]
  $region70: #{tpu_custom_call.1} parent=0
    _
  %s12 = ssub.s32 1, %s10
  %s13 = scalar_select 0, %s12, %s10
  $region1: #{tpu_custom_call.1} parent=0
    #allocation2 [shape = 'u8[4096]{0}', space=vmem, size = 0x1000, scoped, tag = 'input window, operand 0, single buffered']
    #allocation3 [shape = 's32[1]{0}', space=sflag, size = 0x4, scoped, tag = 'scoped memory for tpu_custom_call.1']
    #allocation4 [shape = 's32[1]{0}', space=sflag, size = 0x4, scoped, tag = 'scoped memory for tpu_custom_call.1']
    #allocation5 [shape = 'u8[32768]{0}', space=vmem, size = 0x8000, scoped, tag = 'input window, operand 1, single buffered']
    #allocation6 [shape = 's32[1]{0}', space=sflag, size = 0x4, scoped, tag = 'scoped memory for tpu_custom_call.1']
    #allocation7 [shape = 'u8[32768]{0}', space=vmem, size = 0x8000, scoped, tag = 'input window, operand 3, single buffered']
    #allocation8 [shape = 'u8[32768]{0}', space=vmem, size = 0x8000, scoped, tag = 'input window, operand 5, single buffered']
    #allocation9 [shape = 's32[1]{0}', space=sflag, size = 0x4, scoped, tag = 'scoped memory for tpu_custom_call.1']
    #allocation10 [shape = 'u8[262144]{0}', space=vmem, size = 0x40000, scoped, tag = 'input window, operand 7, single buffered']
    #allocation11 [shape = 'u8[4096]{0}', space=vmem, size = 0x1000, scoped, tag = 'input window, operand 8, single buffered']
    #allocation12 [shape = 's32[1]{0}', space=sflag, size = 0x4, scoped, tag = 'scoped memory for tpu_custom_call.1']
    #allocation13 [shape = 'u8[32768]{0}', space=vmem, size = 0x8000, scoped, tag = 'output window, operand 0, single buffered']
    %14 = vsyncpa [#allocation3], 0
    %15 = vsyncpa [#allocation6], 0
    %16 = vsyncpa [#allocation9], 0
    %17 = vsyncpa [#allocation12], 0
    %18 = vsyncpa [#allocation4], 0
    // Predicated region
    $region2: #{tpu_custom_call.1} parent=1 // pred_check
      _
    $region3: #{tpu_custom_call.1} parent=1 // pred_check_branch
      %20 = sbr.rel (0) target = $region5
    $region4: #{tpu_custom_call.1} parent=1 // pred_region
      %22 = vsyncadd [#allocation3], 0
      %s24 = sshll.u32 %s0, 4
      %s25 = int_to_ptr.hbm [resolvable:$true] %s24
      %s26 = sshll.u32 [#allocation2], 4
      %s27 = int_to_ptr.vmem [resolvable:$true] %s26
      %29 = dma.hbm_to_vmem [thread:$0]  %s25, 128, %s27, [#allocation3]
    $region5: #{tpu_custom_call.1} parent=1 // pred_fallthru
      _
    // Predicated region
    $region6: #{tpu_custom_call.1} parent=1 // pred_check
      _
    $region7: #{tpu_custom_call.1} parent=1 // pred_check_branch
      %31 = sbr.rel (0) target = $region9
    $region8: #{tpu_custom_call.1} parent=1 // pred_region
      %33 = vsyncadd [#allocation6], 0
      %s34 = sshll.u32 %s1, 4
      %s35 = int_to_ptr.hbm [resolvable:$true] %s34
      %s36 = sshll.u32 [#allocation5], 4
      %s37 = int_to_ptr.vmem [resolvable:$true] %s36
      %42 = dma.hbm_to_vmem [thread:$0]  %s35, 1024, %s37, [#allocation6], 64, 64, 4
    $region9: #{tpu_custom_call.1} parent=1 // pred_fallthru
      _
    // Predicated region
    $region10: #{tpu_custom_call.1} parent=1 // pred_check
      _
    $region11: #{tpu_custom_call.1} parent=1 // pred_check_branch
      %44 = sbr.rel (0) target = $region13
    $region12: #{tpu_custom_call.1} parent=1 // pred_region
      _
    $region13: #{tpu_custom_call.1} parent=1 // pred_fallthru
      _
    // Predicated region
    $region14: #{tpu_custom_call.1} parent=1 // pred_check
      _
    $region15: #{tpu_custom_call.1} parent=1 // pred_check_branch
      %46 = sbr.rel (0) target = $region17
    $region16: #{tpu_custom_call.1} parent=1 // pred_region
      %48 = vsyncadd [#allocation6], 0
      %s49 = sshll.u32 %s3, 4
      %s50 = int_to_ptr.hbm [resolvable:$true] %s49
      %s51 = sshll.u32 [#allocation7], 4
      %s52 = int_to_ptr.vmem [resolvable:$true] %s51
      %57 = dma.hbm_to_vmem [thread:$0]  %s50, 1024, %s52, [#allocation6], 64, 64, 4
    $region17: #{tpu_custom_call.1} parent=1 // pred_fallthru
      _
    // Predicated region
    $region18: #{tpu_custom_call.1} parent=1 // pred_check
      _
    $region19: #{tpu_custom_call.1} parent=1 // pred_check_branch
      %59 = sbr.rel (0) target = $region21
    $region20: #{tpu_custom_call.1} parent=1 // pred_region
      _
    $region21: #{tpu_custom_call.1} parent=1 // pred_fallthru
      _
    // Predicated region
    $region22: #{tpu_custom_call.1} parent=1 // pred_check
      _
    $region23: #{tpu_custom_call.1} parent=1 // pred_check_branch
      %61 = sbr.rel (0) target = $region25
    $region24: #{tpu_custom_call.1} parent=1 // pred_region
      %63 = vsyncadd [#allocation9], 0
      %s64 = sshll.u32 %s5, 4
      %s65 = int_to_ptr.hbm [resolvable:$true] %s64
      %s66 = sshll.u32 [#allocation8], 4
      %s67 = int_to_ptr.vmem [resolvable:$true] %s66
      %72 = dma.hbm_to_vmem [thread:$0]  %s65, 1024, %s67, [#allocation9], 64, 64, 4
    $region25: #{tpu_custom_call.1} parent=1 // pred_fallthru
      _
    // Predicated region
    $region26: #{tpu_custom_call.1} parent=1 // pred_check
      _
    $region27: #{tpu_custom_call.1} parent=1 // pred_check_branch
      %74 = sbr.rel (0) target = $region29
    $region28: #{tpu_custom_call.1} parent=1 // pred_region
      _
    $region29: #{tpu_custom_call.1} parent=1 // pred_fallthru
      _
    // Predicated region
    $region30: #{tpu_custom_call.1} parent=1 // pred_check
      _
    $region31: #{tpu_custom_call.1} parent=1 // pred_check_branch
      %76 = sbr.rel (0) target = $region33
    $region32: #{tpu_custom_call.1} parent=1 // pred_region
      %78 = vsyncadd [#allocation9], 0
      %s79 = sshll.u32 %s7, 4
      %s80 = int_to_ptr.hbm [resolvable:$true] %s79
      %s81 = sshll.u32 [#allocation10], 4
      %s82 = int_to_ptr.vmem [resolvable:$true] %s81
      %87 = dma.hbm_to_vmem [thread:$0]  %s80, 8192, %s82, [#allocation9], 512, 512, 32
    $region33: #{tpu_custom_call.1} parent=1 // pred_fallthru
      _
    // Predicated region
    $region34: #{tpu_custom_call.1} parent=1 // pred_check
      _
    $region35: #{tpu_custom_call.1} parent=1 // pred_check_branch
      %89 = sbr.rel (0) target = $region37
    $region36: #{tpu_custom_call.1} parent=1 // pred_region
      %91 = vsyncadd [#allocation12], 0
      %s93 = sshll.u32 %s8, 4
      %s94 = int_to_ptr.hbm [resolvable:$true] %s93
      %s95 = sshll.u32 [#allocation11], 4
      %s96 = int_to_ptr.vmem [resolvable:$true] %s95
      %98 = dma.hbm_to_vmem [thread:$0]  %s94, 128, %s96, [#allocation12]
    $region37: #{tpu_custom_call.1} parent=1 // pred_fallthru
      _
    // Predicated region
    $region38: #{tpu_custom_call.1} parent=1 // pred_check
      _
    $region39: #{tpu_custom_call.1} parent=1 // pred_check_branch
      %100 = sbr.rel (0) target = $region41
    $region40: #{tpu_custom_call.1} parent=1 // pred_region
      %102 = dma.done [#allocation3], 128
    $region41: #{tpu_custom_call.1} parent=1 // pred_fallthru
      _
    // Predicated region
    $region42: #{tpu_custom_call.1} parent=1 // pred_check
      _
    $region43: #{tpu_custom_call.1} parent=1 // pred_check_branch
      %104 = sbr.rel (0) target = $region45
    $region44: #{tpu_custom_call.1} parent=1 // pred_region
      %106 = dma.done [#allocation6], 1024
    $region45: #{tpu_custom_call.1} parent=1 // pred_fallthru
      _
    // Predicated region
    $region46: #{tpu_custom_call.1} parent=1 // pred_check
      _
    $region47: #{tpu_custom_call.1} parent=1 // pred_check_branch
      %108 = sbr.rel (0) target = $region49
    $region48: #{tpu_custom_call.1} parent=1 // pred_region
      %110 = dma.done [#allocation6], 1024
    $region49: #{tpu_custom_call.1} parent=1 // pred_fallthru
      _
    // Predicated region
    $region50: #{tpu_custom_call.1} parent=1 // pred_check
      _
    $region51: #{tpu_custom_call.1} parent=1 // pred_check_branch
      %112 = sbr.rel (0) target = $region53
    $region52: #{tpu_custom_call.1} parent=1 // pred_region
      %114 = dma.done [#allocation9], 1024
    $region53: #{tpu_custom_call.1} parent=1 // pred_fallthru
      _
    // Predicated region
    $region54: #{tpu_custom_call.1} parent=1 // pred_check
      _
    $region55: #{tpu_custom_call.1} parent=1 // pred_check_branch
      %116 = sbr.rel (0) target = $region57
    $region56: #{tpu_custom_call.1} parent=1 // pred_region
      %118 = dma.done [#allocation9], 8192
    $region57: #{tpu_custom_call.1} parent=1 // pred_fallthru
      _
    // Predicated region
    $region58: #{tpu_custom_call.1} parent=1 // pred_check
      _
    $region59: #{tpu_custom_call.1} parent=1 // pred_check_branch
      %120 = sbr.rel (0) target = $region61
    $region60: #{tpu_custom_call.1} parent=1 // pred_region
      %122 = dma.done [#allocation12], 128
    $region61: #{tpu_custom_call.1} parent=1 // pred_fallthru
      _
    %v123 = vld [vmem:[#allocation2] sm:$0xff]
    %v124 = vpack.c.bf16 %v123, %v123
    %v125 = vld [vmem:[#allocation5] sm:$0xf]
    %v126 = vld [vmem:[#allocation5 + $0x4] sm:$0xf]
    %v127 = vld [vmem:[#allocation5 + $0x8] sm:$0xf]
    %v128 = vld [vmem:[#allocation5 + $0xc] sm:$0xf]
    %v129 = vld [vmem:[#allocation5 + $0x10] sm:$0xf]
    %v130 = vld [vmem:[#allocation5 + $0x14] sm:$0xf]
    %v131 = vld [vmem:[#allocation5 + $0x18] sm:$0xf]
    %v132 = vld [vmem:[#allocation5 + $0x1c] sm:$0xf]
    %v133 = vld [vmem:[#allocation5 + $0x20] sm:$0xf]
    %v134 = vld [vmem:[#allocation5 + $0x24] sm:$0xf]
    %v135 = vld [vmem:[#allocation5 + $0x28] sm:$0xf]
    %v136 = vld [vmem:[#allocation5 + $0x2c] sm:$0xf]
    %v137 = vld [vmem:[#allocation5 + $0x30] sm:$0xf]
    %v138 = vld [vmem:[#allocation5 + $0x34] sm:$0xf]
    %v139 = vld [vmem:[#allocation5 + $0x38] sm:$0xf]
    %v140 = vld [vmem:[#allocation5 + $0x3c] sm:$0xf]
    %v141 = vld [vmem:[%s2] sm:$0x1]
    %v143 = vperm.slane %v141, 0
    %v161 = vunpack.c.l.b16 %v125
    %v162 = vunpack.c.l.b16 %v126
    %v163 = vunpack.c.l.b16 %v127
    %v164 = vunpack.c.l.b16 %v128
    %v165 = vunpack.c.l.b16 %v129
    %v166 = vunpack.c.l.b16 %v130
    %v167 = vunpack.c.l.b16 %v131
    %v168 = vunpack.c.l.b16 %v132
    %v169 = vunpack.c.l.b16 %v133
    %v170 = vunpack.c.l.b16 %v134
    %v171 = vunpack.c.l.b16 %v135
    %v172 = vunpack.c.l.b16 %v136
    %v173 = vunpack.c.l.b16 %v137
    %v174 = vunpack.c.l.b16 %v138
    %v175 = vunpack.c.l.b16 %v139
    %v176 = vunpack.c.l.b16 %v140
    %v177 = vpack.c.b16 %v162, %v161
    %v178 = vpack.c.b16 %v164, %v163
    %v179 = vpack.c.b16 %v166, %v165
    %v180 = vpack.c.b16 %v168, %v167
    %v181 = vpack.c.b16 %v170, %v169
    %v182 = vpack.c.b16 %v172, %v171
    %v183 = vpack.c.b16 %v174, %v173
    %v184 = vpack.c.b16 %v176, %v175
    %193 = vmatpush.bf16.msra.mxu0 %v184
    %194 = vmatpush.bf16.msra.mxu0 %v183
    %195 = vmatpush.bf16.msra.mxu0 %v182
    %196 = vmatpush.bf16.msra.mxu0 %v181
    %197 = vmatpush.bf16.msra.mxu0 %v180
    %198 = vmatpush.bf16.msra.mxu0 %v179
    %199 = vmatpush.bf16.msra.mxu0 %v178
    %200 = vmatpush.bf16.msra.mxu0 %v177
    %201 = vmatmul.bf16.gmra.mxu0 %v124
    %v202 = vpop.f32.mrf.mxu0
    %v203 = vadd.f32 %v143, %v202
    %v204 = vpop.f32.mrf.mxu0
    %205 = vdwg.mxu0
    %v206 = vmax.f32 %v203, 0.0
    %v207 = vpack.c.bf16 %v206, %v206
    %v208 = vld [vmem:[#allocation7] sm:$0xf]
    %v209 = vld [vmem:[#allocation7 + $0x4] sm:$0xf]
    %v210 = vld [vmem:[#allocation7 + $0x8] sm:$0xf]
    %v211 = vld [vmem:[#allocation7 + $0xc] sm:$0xf]
    %v212 = vld [vmem:[#allocation7 + $0x10] sm:$0xf]
    %v213 = vld [vmem:[#allocation7 + $0x14] sm:$0xf]
    %v214 = vld [vmem:[#allocation7 + $0x18] sm:$0xf]
    %v215 = vld [vmem:[#allocation7 + $0x1c] sm:$0xf]
    %v216 = vld [vmem:[#allocation7 + $0x20] sm:$0xf]
    %v217 = vld [vmem:[#allocation7 + $0x24] sm:$0xf]
    %v218 = vld [vmem:[#allocation7 + $0x28] sm:$0xf]
    %v219 = vld [vmem:[#allocation7 + $0x2c] sm:$0xf]
    %v220 = vld [vmem:[#allocation7 + $0x30] sm:$0xf]
    %v221 = vld [vmem:[#allocation7 + $0x34] sm:$0xf]
    %v222 = vld [vmem:[#allocation7 + $0x38] sm:$0xf]
    %v223 = vld [vmem:[#allocation7 + $0x3c] sm:$0xf]
    %v224 = vld [vmem:[%s4] sm:$0x1]
    %v226 = vperm.slane %v224, 0
    %v244 = vunpack.c.l.b16 %v208
    %v245 = vunpack.c.l.b16 %v209
    %v246 = vunpack.c.l.b16 %v210
    %v247 = vunpack.c.l.b16 %v211
    %v248 = vunpack.c.l.b16 %v212
    %v249 = vunpack.c.l.b16 %v213
    %v250 = vunpack.c.l.b16 %v214
    %v251 = vunpack.c.l.b16 %v215
    %v252 = vunpack.c.l.b16 %v216
    %v253 = vunpack.c.l.b16 %v217
    %v254 = vunpack.c.l.b16 %v218
    %v255 = vunpack.c.l.b16 %v219
    %v256 = vunpack.c.l.b16 %v220
    %v257 = vunpack.c.l.b16 %v221
    %v258 = vunpack.c.l.b16 %v222
    %v259 = vunpack.c.l.b16 %v223
    %v260 = vpack.c.b16 %v245, %v244
    %v261 = vpack.c.b16 %v247, %v246
    %v262 = vpack.c.b16 %v249, %v248
    %v263 = vpack.c.b16 %v251, %v250
    %v264 = vpack.c.b16 %v253, %v252
    %v265 = vpack.c.b16 %v255, %v254
    %v266 = vpack.c.b16 %v257, %v256
    %v267 = vpack.c.b16 %v259, %v258
    %276 = vmatpush.bf16.msra.mxu0 %v267
    %277 = vmatpush.bf16.msra.mxu0 %v266
    %278 = vmatpush.bf16.msra.mxu0 %v265
    %279 = vmatpush.bf16.msra.mxu0 %v264
    %280 = vmatpush.bf16.msra.mxu0 %v263
    %281 = vmatpush.bf16.msra.mxu0 %v262
    %282 = vmatpush.bf16.msra.mxu0 %v261
    %283 = vmatpush.bf16.msra.mxu0 %v260
    %284 = vmatmul.bf16.gmra.mxu0 %v207
    %v285 = vpop.f32.mrf.mxu0
    %v286 = vadd.f32 %v226, %v285
    %v287 = vpop.f32.mrf.mxu0
    %288 = vdwg.mxu0
    %v289 = vmax.f32 %v286, 0.0
    %v290 = vpack.c.bf16 %v289, %v289
    %v291 = vld [vmem:[#allocation8] sm:$0xf]
    %v292 = vld [vmem:[#allocation8 + $0x4] sm:$0xf]
    %v293 = vld [vmem:[#allocation8 + $0x8] sm:$0xf]
    %v294 = vld [vmem:[#allocation8 + $0xc] sm:$0xf]
    %v295 = vld [vmem:[#allocation8 + $0x10] sm:$0xf]
    %v296 = vld [vmem:[#allocation8 + $0x14] sm:$0xf]
    %v297 = vld [vmem:[#allocation8 + $0x18] sm:$0xf]
    %v298 = vld [vmem:[#allocation8 + $0x1c] sm:$0xf]
    %v299 = vld [vmem:[#allocation8 + $0x20] sm:$0xf]
    %v300 = vld [vmem:[#allocation8 + $0x24] sm:$0xf]
    %v301 = vld [vmem:[#allocation8 + $0x28] sm:$0xf]
    %v302 = vld [vmem:[#allocation8 + $0x2c] sm:$0xf]
    %v303 = vld [vmem:[#allocation8 + $0x30] sm:$0xf]
    %v304 = vld [vmem:[#allocation8 + $0x34] sm:$0xf]
    %v305 = vld [vmem:[#allocation8 + $0x38] sm:$0xf]
    %v306 = vld [vmem:[#allocation8 + $0x3c] sm:$0xf]
    %v307 = vld [vmem:[%s6] sm:$0x1]
    %v309 = vperm.slane %v307, 0
    %v327 = vunpack.c.l.b16 %v291
    %v328 = vunpack.c.l.b16 %v292
    %v329 = vunpack.c.l.b16 %v293
    %v330 = vunpack.c.l.b16 %v294
    %v331 = vunpack.c.l.b16 %v295
    %v332 = vunpack.c.l.b16 %v296
    %v333 = vunpack.c.l.b16 %v297
    %v334 = vunpack.c.l.b16 %v298
    %v335 = vunpack.c.l.b16 %v299
    %v336 = vunpack.c.l.b16 %v300
    %v337 = vunpack.c.l.b16 %v301
    %v338 = vunpack.c.l.b16 %v302
    %v339 = vunpack.c.l.b16 %v303
    %v340 = vunpack.c.l.b16 %v304
    %v341 = vunpack.c.l.b16 %v305
    %v342 = vunpack.c.l.b16 %v306
    %v343 = vpack.c.b16 %v328, %v327
    %v344 = vpack.c.b16 %v330, %v329
    %v345 = vpack.c.b16 %v332, %v331
    %v346 = vpack.c.b16 %v334, %v333
    %v347 = vpack.c.b16 %v336, %v335
    %v348 = vpack.c.b16 %v338, %v337
    %v349 = vpack.c.b16 %v340, %v339
    %v350 = vpack.c.b16 %v342, %v341
    %359 = vmatpush.bf16.msra.mxu0 %v350
    %360 = vmatpush.bf16.msra.mxu0 %v349
    %361 = vmatpush.bf16.msra.mxu0 %v348
    %362 = vmatpush.bf16.msra.mxu0 %v347
    %363 = vmatpush.bf16.msra.mxu0 %v346
    %364 = vmatpush.bf16.msra.mxu0 %v345
    %365 = vmatpush.bf16.msra.mxu0 %v344
    %366 = vmatpush.bf16.msra.mxu0 %v343
    %367 = vmatmul.bf16.gmra.mxu0 %v290
    %v368 = vpop.f32.mrf.mxu0
    %v369 = vadd.f32 %v309, %v368
    %v370 = vpop.f32.mrf.mxu0
    %371 = vdwg.mxu0
    %v372 = vmax.f32 %v369, 0.0
    %v373 = vpack.c.bf16 %v372, %v372
    %v374 = vld [vmem:[#allocation10] sm:$0xff]
    %v375 = vld [vmem:[#allocation10 + $0x8] sm:$0xff]
    %v376 = vld [vmem:[#allocation10 + $0x10] sm:$0xff]
    %v377 = vld [vmem:[#allocation10 + $0x18] sm:$0xff]
    %v378 = vld [vmem:[#allocation10 + $0x20] sm:$0xff]
    %v379 = vld [vmem:[#allocation10 + $0x28] sm:$0xff]
    %v380 = vld [vmem:[#allocation10 + $0x30] sm:$0xff]
    %v381 = vld [vmem:[#allocation10 + $0x38] sm:$0xff]
    %v382 = vld [vmem:[#allocation10 + $0x40] sm:$0xff]
    %v383 = vld [vmem:[#allocation10 + $0x48] sm:$0xff]
    %v384 = vld [vmem:[#allocation10 + $0x50] sm:$0xff]
    %v385 = vld [vmem:[#allocation10 + $0x58] sm:$0xff]
    %v386 = vld [vmem:[#allocation10 + $0x60] sm:$0xff]
    %v387 = vld [vmem:[#allocation10 + $0x68] sm:$0xff]
    %v388 = vld [vmem:[#allocation10 + $0x70] sm:$0xff]
    %v389 = vld [vmem:[#allocation10 + $0x78] sm:$0xff]
    %v390 = vld [vmem:[#allocation10 + $0x80] sm:$0xff]
    %v391 = vld [vmem:[#allocation10 + $0x88] sm:$0xff]
    %v392 = vld [vmem:[#allocation10 + $0x90] sm:$0xff]
    %v393 = vld [vmem:[#allocation10 + $0x98] sm:$0xff]
    %v394 = vld [vmem:[#allocation10 + $0xa0] sm:$0xff]
    %v395 = vld [vmem:[#allocation10 + $0xa8] sm:$0xff]
    %v396 = vld [vmem:[#allocation10 + $0xb0] sm:$0xff]
    %v397 = vld [vmem:[#allocation10 + $0xb8] sm:$0xff]
    %v398 = vld [vmem:[#allocation10 + $0xc0] sm:$0xff]
    %v399 = vld [vmem:[#allocation10 + $0xc8] sm:$0xff]
    %v400 = vld [vmem:[#allocation10 + $0xd0] sm:$0xff]
    %v401 = vld [vmem:[#allocation10 + $0xd8] sm:$0xff]
    %v402 = vld [vmem:[#allocation10 + $0xe0] sm:$0xff]
    %v403 = vld [vmem:[#allocation10 + $0xe8] sm:$0xff]
    %v404 = vld [vmem:[#allocation10 + $0xf0] sm:$0xff]
    %v405 = vld [vmem:[#allocation10 + $0xf8] sm:$0xff]
    %v406 = vld [vmem:[#allocation10 + $0x100] sm:$0xff]
    %v407 = vld [vmem:[#allocation10 + $0x108] sm:$0xff]
    %v408 = vld [vmem:[#allocation10 + $0x110] sm:$0xff]
    %v409 = vld [vmem:[#allocation10 + $0x118] sm:$0xff]
    %v410 = vld [vmem:[#allocation10 + $0x120] sm:$0xff]
    %v411 = vld [vmem:[#allocation10 + $0x128] sm:$0xff]
    %v412 = vld [vmem:[#allocation10 + $0x130] sm:$0xff]
    %v413 = vld [vmem:[#allocation10 + $0x138] sm:$0xff]
    %v414 = vld [vmem:[#allocation10 + $0x140] sm:$0xff]
    %v415 = vld [vmem:[#allocation10 + $0x148] sm:$0xff]
    %v416 = vld [vmem:[#allocation10 + $0x150] sm:$0xff]
    %v417 = vld [vmem:[#allocation10 + $0x158] sm:$0xff]
    %v418 = vld [vmem:[#allocation10 + $0x160] sm:$0xff]
    %v419 = vld [vmem:[#allocation10 + $0x168] sm:$0xff]
    %v420 = vld [vmem:[#allocation10 + $0x170] sm:$0xff]
    %v421 = vld [vmem:[#allocation10 + $0x178] sm:$0xff]
    %v422 = vld [vmem:[#allocation10 + $0x180] sm:$0xff]
    %v423 = vld [vmem:[#allocation10 + $0x188] sm:$0xff]
    %v424 = vld [vmem:[#allocation10 + $0x190] sm:$0xff]
    %v425 = vld [vmem:[#allocation10 + $0x198] sm:$0xff]
    %v426 = vld [vmem:[#allocation10 + $0x1a0] sm:$0xff]
    %v427 = vld [vmem:[#allocation10 + $0x1a8] sm:$0xff]
    %v428 = vld [vmem:[#allocation10 + $0x1b0] sm:$0xff]
    %v429 = vld [vmem:[#allocation10 + $0x1b8] sm:$0xff]
    %v430 = vld [vmem:[#allocation10 + $0x1c0] sm:$0xff]
    %v431 = vld [vmem:[#allocation10 + $0x1c8] sm:$0xff]
    %v432 = vld [vmem:[#allocation10 + $0x1d0] sm:$0xff]
    %v433 = vld [vmem:[#allocation10 + $0x1d8] sm:$0xff]
    %v434 = vld [vmem:[#allocation10 + $0x1e0] sm:$0xff]
    %v435 = vld [vmem:[#allocation10 + $0x1e8] sm:$0xff]
    %v436 = vld [vmem:[#allocation10 + $0x1f0] sm:$0xff]
    %v437 = vld [vmem:[#allocation10 + $0x1f8] sm:$0xff]
    %v438 = vld [vmem:[#allocation11] sm:$0xff]
    %v440 = vperm.slane %v438, 0
    %v441 = vperm.slane %v438, 1
    %v442 = vperm.slane %v438, 2
    %v443 = vperm.slane %v438, 3
    %v444 = vperm.slane %v438, 4
    %v445 = vperm.slane %v438, 5
    %v446 = vperm.slane %v438, 6
    %v447 = vperm.slane %v438, 7
    %v520 = vunpack.c.l.b16 %v374
    %v521 = vunpack.c.h.b16 %v374
    %v522 = vunpack.c.l.b16 %v375
    %v523 = vunpack.c.h.b16 %v375
    %v524 = vunpack.c.l.b16 %v376
    %v525 = vunpack.c.h.b16 %v376
    %v526 = vunpack.c.l.b16 %v377
    %v527 = vunpack.c.h.b16 %v377
    %v528 = vunpack.c.l.b16 %v378
    %v529 = vunpack.c.h.b16 %v378
    %v530 = vunpack.c.l.b16 %v379
    %v531 = vunpack.c.h.b16 %v379
    %v532 = vunpack.c.l.b16 %v380
    %v533 = vunpack.c.h.b16 %v380
    %v534 = vunpack.c.l.b16 %v381
    %v535 = vunpack.c.h.b16 %v381
    %v536 = vunpack.c.l.b16 %v382
    %v537 = vunpack.c.h.b16 %v382
    %v538 = vunpack.c.l.b16 %v383
    %v539 = vunpack.c.h.b16 %v383
    %v540 = vunpack.c.l.b16 %v384
    %v541 = vunpack.c.h.b16 %v384
    %v542 = vunpack.c.l.b16 %v385
    %v543 = vunpack.c.h.b16 %v385
    %v544 = vunpack.c.l.b16 %v386
    %v545 = vunpack.c.h.b16 %v386
    %v546 = vunpack.c.l.b16 %v387
    %v547 = vunpack.c.h.b16 %v387
    %v548 = vunpack.c.l.b16 %v388
    %v549 = vunpack.c.h.b16 %v388
    %v550 = vunpack.c.l.b16 %v389
    %v551 = vunpack.c.h.b16 %v389
    %v552 = vunpack.c.l.b16 %v390
    %v553 = vunpack.c.h.b16 %v390
    %v554 = vunpack.c.l.b16 %v391
    %v555 = vunpack.c.h.b16 %v391
    %v556 = vunpack.c.l.b16 %v392
    %v557 = vunpack.c.h.b16 %v392
    %v558 = vunpack.c.l.b16 %v393
    %v559 = vunpack.c.h.b16 %v393
    %v560 = vunpack.c.l.b16 %v394
    %v561 = vunpack.c.h.b16 %v394
    %v562 = vunpack.c.l.b16 %v395
    %v563 = vunpack.c.h.b16 %v395
    %v564 = vunpack.c.l.b16 %v396
    %v565 = vunpack.c.h.b16 %v396
    %v566 = vunpack.c.l.b16 %v397
    %v567 = vunpack.c.h.b16 %v397
    %v568 = vunpack.c.l.b16 %v398
    %v569 = vunpack.c.h.b16 %v398
    %v570 = vunpack.c.l.b16 %v399
    %v571 = vunpack.c.h.b16 %v399
    %v572 = vunpack.c.l.b16 %v400
    %v573 = vunpack.c.h.b16 %v400
    %v574 = vunpack.c.l.b16 %v401
    %v575 = vunpack.c.h.b16 %v401
    %v576 = vunpack.c.l.b16 %v402
    %v577 = vunpack.c.h.b16 %v402
    %v578 = vunpack.c.l.b16 %v403
    %v579 = vunpack.c.h.b16 %v403
    %v580 = vunpack.c.l.b16 %v404
    %v581 = vunpack.c.h.b16 %v404
    %v582 = vunpack.c.l.b16 %v405
    %v583 = vunpack.c.h.b16 %v405
    %v584 = vunpack.c.l.b16 %v406
    %v585 = vunpack.c.h.b16 %v406
    %v586 = vunpack.c.l.b16 %v407
    %v587 = vunpack.c.h.b16 %v407
    %v588 = vunpack.c.l.b16 %v408
    %v589 = vunpack.c.h.b16 %v408
    %v590 = vunpack.c.l.b16 %v409
    %v591 = vunpack.c.h.b16 %v409
    %v592 = vunpack.c.l.b16 %v410
    %v593 = vunpack.c.h.b16 %v410
    %v594 = vunpack.c.l.b16 %v411
    %v595 = vunpack.c.h.b16 %v411
    %v596 = vunpack.c.l.b16 %v412
    %v597 = vunpack.c.h.b16 %v412
    %v598 = vunpack.c.l.b16 %v413
    %v599 = vunpack.c.h.b16 %v413
    %v600 = vunpack.c.l.b16 %v414
    %v601 = vunpack.c.h.b16 %v414
    %v602 = vunpack.c.l.b16 %v415
    %v603 = vunpack.c.h.b16 %v415
    %v604 = vunpack.c.l.b16 %v416
    %v605 = vunpack.c.h.b16 %v416
    %v606 = vunpack.c.l.b16 %v417
    %v607 = vunpack.c.h.b16 %v417
    %v608 = vunpack.c.l.b16 %v418
    %v609 = vunpack.c.h.b16 %v418
    %v610 = vunpack.c.l.b16 %v419
    %v611 = vunpack.c.h.b16 %v419
    %v612 = vunpack.c.l.b16 %v420
    %v613 = vunpack.c.h.b16 %v420
    %v614 = vunpack.c.l.b16 %v421
    %v615 = vunpack.c.h.b16 %v421
    %v616 = vunpack.c.l.b16 %v422
    %v617 = vunpack.c.h.b16 %v422
    %v618 = vunpack.c.l.b16 %v423
    %v619 = vunpack.c.h.b16 %v423
    %v620 = vunpack.c.l.b16 %v424
    %v621 = vunpack.c.h.b16 %v424
    %v622 = vunpack.c.l.b16 %v425
    %v623 = vunpack.c.h.b16 %v425
    %v624 = vunpack.c.l.b16 %v426
    %v625 = vunpack.c.h.b16 %v426
    %v626 = vunpack.c.l.b16 %v427
    %v627 = vunpack.c.h.b16 %v427
    %v628 = vunpack.c.l.b16 %v428
    %v629 = vunpack.c.h.b16 %v428
    %v630 = vunpack.c.l.b16 %v429
    %v631 = vunpack.c.h.b16 %v429
    %v632 = vunpack.c.l.b16 %v430
    %v633 = vunpack.c.h.b16 %v430
    %v634 = vunpack.c.l.b16 %v431
    %v635 = vunpack.c.h.b16 %v431
    %v636 = vunpack.c.l.b16 %v432
    %v637 = vunpack.c.h.b16 %v432
    %v638 = vunpack.c.l.b16 %v433
    %v639 = vunpack.c.h.b16 %v433
    %v640 = vunpack.c.l.b16 %v434
    %v641 = vunpack.c.h.b16 %v434
    %v642 = vunpack.c.l.b16 %v435
    %v643 = vunpack.c.h.b16 %v435
    %v644 = vunpack.c.l.b16 %v436
    %v645 = vunpack.c.h.b16 %v436
    %v646 = vunpack.c.l.b16 %v437
    %v647 = vunpack.c.h.b16 %v437
    %v648 = vpack.c.b16 %v528, %v520
    %v649 = vpack.c.b16 %v529, %v521
    %v650 = vpack.c.b16 %v530, %v522
    %v651 = vpack.c.b16 %v531, %v523
    %v652 = vpack.c.b16 %v532, %v524
    %v653 = vpack.c.b16 %v533, %v525
    %v654 = vpack.c.b16 %v534, %v526
    %v655 = vpack.c.b16 %v535, %v527
    %v656 = vpack.c.b16 %v544, %v536
    %v657 = vpack.c.b16 %v545, %v537
    %v658 = vpack.c.b16 %v546, %v538
    %v659 = vpack.c.b16 %v547, %v539
    %v660 = vpack.c.b16 %v548, %v540
    %v661 = vpack.c.b16 %v549, %v541
    %v662 = vpack.c.b16 %v550, %v542
    %v663 = vpack.c.b16 %v551, %v543
    %v664 = vpack.c.b16 %v560, %v552
    %v665 = vpack.c.b16 %v561, %v553
    %v666 = vpack.c.b16 %v562, %v554
    %v667 = vpack.c.b16 %v563, %v555
    %v668 = vpack.c.b16 %v564, %v556
    %v669 = vpack.c.b16 %v565, %v557
    %v670 = vpack.c.b16 %v566, %v558
    %v671 = vpack.c.b16 %v567, %v559
    %v672 = vpack.c.b16 %v576, %v568
    %v673 = vpack.c.b16 %v577, %v569
    %v674 = vpack.c.b16 %v578, %v570
    %v675 = vpack.c.b16 %v579, %v571
    %v676 = vpack.c.b16 %v580, %v572
    %v677 = vpack.c.b16 %v581, %v573
    %v678 = vpack.c.b16 %v582, %v574
    %v679 = vpack.c.b16 %v583, %v575
    %v680 = vpack.c.b16 %v592, %v584
    %v681 = vpack.c.b16 %v593, %v585
    %v682 = vpack.c.b16 %v594, %v586
    %v683 = vpack.c.b16 %v595, %v587
    %v684 = vpack.c.b16 %v596, %v588
    %v685 = vpack.c.b16 %v597, %v589
    %v686 = vpack.c.b16 %v598, %v590
    %v687 = vpack.c.b16 %v599, %v591
    %v688 = vpack.c.b16 %v608, %v600
    %v689 = vpack.c.b16 %v609, %v601
    %v690 = vpack.c.b16 %v610, %v602
    %v691 = vpack.c.b16 %v611, %v603
    %v692 = vpack.c.b16 %v612, %v604
    %v693 = vpack.c.b16 %v613, %v605
    %v694 = vpack.c.b16 %v614, %v606
    %v695 = vpack.c.b16 %v615, %v607
    %v696 = vpack.c.b16 %v624, %v616
    %v697 = vpack.c.b16 %v625, %v617
    %v698 = vpack.c.b16 %v626, %v618
    %v699 = vpack.c.b16 %v627, %v619
    %v700 = vpack.c.b16 %v628, %v620
    %v701 = vpack.c.b16 %v629, %v621
    %v702 = vpack.c.b16 %v630, %v622
    %v703 = vpack.c.b16 %v631, %v623
    %v704 = vpack.c.b16 %v640, %v632
    %v705 = vpack.c.b16 %v641, %v633
    %v706 = vpack.c.b16 %v642, %v634
    %v707 = vpack.c.b16 %v643, %v635
    %v708 = vpack.c.b16 %v644, %v636
    %v709 = vpack.c.b16 %v645, %v637
    %v710 = vpack.c.b16 %v646, %v638
    %v711 = vpack.c.b16 %v647, %v639
    %776 = vmatpush.bf16.msra.mxu0 %v704
    %777 = vmatpush.bf16.msra.mxu0 %v696
    %778 = vmatpush.bf16.msra.mxu0 %v688
    %779 = vmatpush.bf16.msra.mxu0 %v680
    %780 = vmatpush.bf16.msra.mxu0 %v672
    %781 = vmatpush.bf16.msra.mxu0 %v664
    %782 = vmatpush.bf16.msra.mxu0 %v656
    %783 = vmatpush.bf16.msra.mxu0 %v648
    %784 = vmatmul.bf16.gmra.mxu0 %v373
    %v785 = vpop.f32.mrf.mxu0
    %v786 = vadd.f32 %v440, %v785
    %v787 = vpop.f32.mrf.mxu0
    %788 = vdwg.mxu0
    %789 = vmatpush.bf16.msra.mxu0 %v705
    %790 = vmatpush.bf16.msra.mxu0 %v697
    %791 = vmatpush.bf16.msra.mxu0 %v689
    %792 = vmatpush.bf16.msra.mxu0 %v681
    %793 = vmatpush.bf16.msra.mxu0 %v673
    %794 = vmatpush.bf16.msra.mxu0 %v665
    %795 = vmatpush.bf16.msra.mxu0 %v657
    %796 = vmatpush.bf16.msra.mxu0 %v649
    %797 = vmatmul.bf16.gmra.mxu0 %v373
    %v798 = vpop.f32.mrf.mxu0
    %v799 = vadd.f32 %v441, %v798
    %v800 = vpop.f32.mrf.mxu0
    %801 = vdwg.mxu0
    %802 = vmatpush.bf16.msra.mxu0 %v706
    %803 = vmatpush.bf16.msra.mxu0 %v698
    %804 = vmatpush.bf16.msra.mxu0 %v690
    %805 = vmatpush.bf16.msra.mxu0 %v682
    %806 = vmatpush.bf16.msra.mxu0 %v674
    %807 = vmatpush.bf16.msra.mxu0 %v666
    %808 = vmatpush.bf16.msra.mxu0 %v658
    %809 = vmatpush.bf16.msra.mxu0 %v650
    %810 = vmatmul.bf16.gmra.mxu0 %v373
    %v811 = vpop.f32.mrf.mxu0
    %v812 = vadd.f32 %v442, %v811
    %v813 = vpop.f32.mrf.mxu0
    %814 = vdwg.mxu0
    %815 = vmatpush.bf16.msra.mxu0 %v707
    %816 = vmatpush.bf16.msra.mxu0 %v699
    %817 = vmatpush.bf16.msra.mxu0 %v691
    %818 = vmatpush.bf16.msra.mxu0 %v683
    %819 = vmatpush.bf16.msra.mxu0 %v675
    %820 = vmatpush.bf16.msra.mxu0 %v667
    %821 = vmatpush.bf16.msra.mxu0 %v659
    %822 = vmatpush.bf16.msra.mxu0 %v651
    %823 = vmatmul.bf16.gmra.mxu0 %v373
    %v824 = vpop.f32.mrf.mxu0
    %v825 = vadd.f32 %v443, %v824
    %v826 = vpop.f32.mrf.mxu0
    %827 = vdwg.mxu0
    %828 = vmatpush.bf16.msra.mxu0 %v708
    %829 = vmatpush.bf16.msra.mxu0 %v700
    %830 = vmatpush.bf16.msra.mxu0 %v692
    %831 = vmatpush.bf16.msra.mxu0 %v684
    %832 = vmatpush.bf16.msra.mxu0 %v676
    %833 = vmatpush.bf16.msra.mxu0 %v668
    %834 = vmatpush.bf16.msra.mxu0 %v660
    %835 = vmatpush.bf16.msra.mxu0 %v652
    %836 = vmatmul.bf16.gmra.mxu0 %v373
    %v837 = vpop.f32.mrf.mxu0
    %v838 = vadd.f32 %v444, %v837
    %v839 = vpop.f32.mrf.mxu0
    %840 = vdwg.mxu0
    %841 = vmatpush.bf16.msra.mxu0 %v709
    %842 = vmatpush.bf16.msra.mxu0 %v701
    %843 = vmatpush.bf16.msra.mxu0 %v693
    %844 = vmatpush.bf16.msra.mxu0 %v685
    %845 = vmatpush.bf16.msra.mxu0 %v677
    %846 = vmatpush.bf16.msra.mxu0 %v669
    %847 = vmatpush.bf16.msra.mxu0 %v661
    %848 = vmatpush.bf16.msra.mxu0 %v653
    %849 = vmatmul.bf16.gmra.mxu0 %v373
    %v850 = vpop.f32.mrf.mxu0
    %v851 = vadd.f32 %v445, %v850
    %v852 = vpop.f32.mrf.mxu0
    %853 = vdwg.mxu0
    %854 = vmatpush.bf16.msra.mxu0 %v710
    %855 = vmatpush.bf16.msra.mxu0 %v702
    %856 = vmatpush.bf16.msra.mxu0 %v694
    %857 = vmatpush.bf16.msra.mxu0 %v686
    %858 = vmatpush.bf16.msra.mxu0 %v678
    %859 = vmatpush.bf16.msra.mxu0 %v670
    %860 = vmatpush.bf16.msra.mxu0 %v662
    %861 = vmatpush.bf16.msra.mxu0 %v654
    %862 = vmatmul.bf16.gmra.mxu0 %v373
    %v863 = vpop.f32.mrf.mxu0
    %v864 = vadd.f32 %v446, %v863
    %v865 = vpop.f32.mrf.mxu0
    %866 = vdwg.mxu0
    %867 = vmatpush.bf16.msra.mxu0 %v711
    %868 = vmatpush.bf16.msra.mxu0 %v703
    %869 = vmatpush.bf16.msra.mxu0 %v695
    %870 = vmatpush.bf16.msra.mxu0 %v687
    %871 = vmatpush.bf16.msra.mxu0 %v679
    %872 = vmatpush.bf16.msra.mxu0 %v671
    %873 = vmatpush.bf16.msra.mxu0 %v663
    %874 = vmatpush.bf16.msra.mxu0 %v655
    %875 = vmatmul.bf16.gmra.mxu0 %v373
    %v876 = vpop.f32.mrf.mxu0
    %v877 = vadd.f32 %v447, %v876
    %v878 = vpop.f32.mrf.mxu0
    %879 = vdwg.mxu0
    %880 = vst [vmem:[#allocation13] sm:$0xff] %v786
    %881 = vst [vmem:[#allocation13 + $0x8] sm:$0xff] %v799
    %882 = vst [vmem:[#allocation13 + $0x10] sm:$0xff] %v812
    %883 = vst [vmem:[#allocation13 + $0x18] sm:$0xff] %v825
    %884 = vst [vmem:[#allocation13 + $0x20] sm:$0xff] %v838
    %885 = vst [vmem:[#allocation13 + $0x28] sm:$0xff] %v851
    %886 = vst [vmem:[#allocation13 + $0x30] sm:$0xff] %v864
    %887 = vst [vmem:[#allocation13 + $0x38] sm:$0xff] %v877
    // Predicated region
    $region62: #{tpu_custom_call.1} parent=1 // pred_check
      _
    $region63: #{tpu_custom_call.1} parent=1 // pred_check_branch
      %889 = sbr.rel (0) target = $region65
    $region64: #{tpu_custom_call.1} parent=1 // pred_region
      %891 = vsyncadd [#allocation4], 0
      %s893 = sshll.u32 [#allocation13], 4
      %s894 = int_to_ptr.vmem [resolvable:$true] %s893
      %s895 = sshll.u32 %s9, 4
      %s896 = int_to_ptr.hbm [resolvable:$true] %s895
      %898 = dma.vmem_to_hbm [thread:$0]  %s894, 1024, %s896, [#allocation4]
    $region65: #{tpu_custom_call.1} parent=1 // pred_fallthru
      _
    // Predicated region
    $region66: #{tpu_custom_call.1} parent=1 // pred_check
      _
    $region67: #{tpu_custom_call.1} parent=1 // pred_check_branch
      %900 = sbr.rel (0) target = $region69
    $region68: #{tpu_custom_call.1} parent=1 // pred_region
      %902 = dma.done [#allocation4], 1024
    $region69: #{tpu_custom_call.1} parent=1 // pred_fallthru
      _
    %903 = vsyncpa [#allocation3], 1
    %904 = vsyncpa [#allocation6], 1
    %905 = vsyncpa [#allocation9], 1
    %906 = vsyncpa [#allocation12], 1
    %907 = vsyncpa [#allocation4], 1

</llo_original>
